<compile_context>
chip_gen: v6e
topology: v6e:2x2x1
jax: 0.10.0
libtpu: 0.0.40
codegen_flags: <defaults>
</compile_context>

<pallas_src>
import functools

import jax
import jax.numpy as jnp
from jax import lax
from jax.experimental import pallas as pl
from jax.experimental.pallas import tpu as pltpu


def _pick_tile(n, preferred=(512, 256, 128)):
    """Largest MXU-friendly tile that divides n, else the full extent."""
    for t in preferred:
        if n % t == 0:
            return t
    return n


def _diag_kernel(im_ref, s_ref, dcol_ref):
    # diag[i] = <im_i, s_i> as a rowwise dot: (TM,D) elementwise mul + reduce.
    prod = im_ref[...].astype(jnp.float32) * s_ref[...].astype(jnp.float32)
    dcol_ref[...] = jnp.sum(prod, axis=1, keepdims=True)  # (TM, 1)


def _cost_kernel(im_ref, s_ref, dcol_ref, drow_ref, out_ref, *, margin):
    # scores[i, j] = <im_i, s_j>; contraction on the last (lane) axis of both
    # operands so the MXU is fed directly (no XLU transpose of the s tile).
    scores = lax.dot_general(
        im_ref[...],
        s_ref[...],
        dimension_numbers=(((1,), (1,)), ((), ())),
        preferred_element_type=jnp.float32,
    )  # (TM, TN) f32

    d1 = dcol_ref[...]  # (TM, 1): diag of the row block, broadcasts over j
    d2 = drow_ref[...]  # (1, TN): diag of the col block, broadcasts over i

    cost_s = jnp.maximum(margin + scores - d1, 0.0)
    cost_im = jnp.maximum(margin + scores - d2, 0.0)

    # No eye-masking here: the (i == j) entries of both hinge matrices are
    # exactly max(margin, 0); the wrapper subtracts 2*B*max(margin, 0).
    out_ref[0, 0] = jnp.sum(cost_s + cost_im)


def contrastive_loss(im, s, margin=0.0):
    """Pallas TPU implementation of ContrastiveLoss.forward (cosine_sim path)."""
    assert im.ndim == 2 and im.shape == s.shape
    B, D = im.shape
    tm = _pick_tile(B)
    tn = _pick_tile(B)
    gi, gj = B // tm, B // tn
    itemsize = jnp.dtype(im.dtype).itemsize

    # ---- pass 1: diagonal of the score matrix (rowwise dot), (B, 1) layout.
    d_col = pl.pallas_call(
        _diag_kernel,
        out_shape=jax.ShapeDtypeStruct((B, 1), jnp.float32),
        grid_spec=pltpu.PrefetchScalarGridSpec(
            num_scalar_prefetch=0,
            grid=(gi,),
            in_specs=[
                pl.BlockSpec((tm, D), lambda i: (i, 0)),
                pl.BlockSpec((tm, D), lambda i: (i, 0)),
            ],
            out_specs=pl.BlockSpec((tm, 1), lambda i: (i, 0)),
        ),
        compiler_params=pltpu.CompilerParams(
            dimension_semantics=("parallel",)
        ),
    )(im, s)

    # (1, B) layout derived once, outside the per-tile loop (tiny relayout).
    d_row = d_col.reshape(1, B)

    # ---- pass 2: tiled hinge costs; one scalar partial per (i, j) tile.
    kernel = functools.partial(_cost_kernel, margin=float(margin))
    partials = pl.pallas_call(
        kernel,
        out_shape=jax.ShapeDtypeStruct((gi, gj), jnp.float32),
        grid_spec=pltpu.PrefetchScalarGridSpec(
            num_scalar_prefetch=0,
            grid=(gi, gj),
            in_specs=[
                pl.BlockSpec((tm, D), lambda i, j: (i, 0)),   # im row block
                pl.BlockSpec((tn, D), lambda i, j: (j, 0)),   # s  col block
                pl.BlockSpec((tm, 1), lambda i, j: (i, 0)),   # diag (rows)
                pl.BlockSpec((1, tn), lambda i, j: (0, j)),   # diag (cols)
            ],
            out_specs=pl.BlockSpec(
                (1, 1), lambda i, j: (i, j), memory_space=pltpu.SMEM
            ),
        ),
        compiler_params=pltpu.CompilerParams(
            dimension_semantics=("parallel", "parallel")
        ),
        cost_estimate=pl.CostEstimate(
            flops=2 * B * B * D,
            transcendentals=0,
            bytes_accessed=2 * B * D * itemsize + (2 * B + gi * gj) * 4,
        ),
    )(im, s, d_col, d_row)

    # Closed-form diagonal correction (each cost matrix has max(margin, 0)
    # on its diagonal; the reference masks it to 0).
    return jnp.sum(partials) - 2.0 * B * max(float(margin), 0.0)


def contrastive_loss_ref(im, s, margin=0.0):
    """Pure-JAX reference mirroring the PyTorch module."""
    scores = im @ s.T
    diag = jnp.diag(scores).reshape(-1, 1)
    cost_s = jnp.maximum(margin + scores - diag, 0.0)
    cost_im = jnp.maximum(margin + scores - diag.T, 0.0)
    eye = jnp.eye(scores.shape[0], dtype=bool)
    cost_s = jnp.where(eye, 0.0, cost_s)
    cost_im = jnp.where(eye, 0.0, cost_im)
    return jnp.sum(cost_s) + jnp.sum(cost_im)


if __name__ == "__main__":
    key = jax.random.PRNGKey(0)
    k_im, k_s = jax.random.split(key)
    B, D = 8, 32
    im = jax.random.normal(k_im, (B, D), dtype=jnp.float32)
    s = jax.random.normal(k_s, (B, D), dtype=jnp.float32)

    # margin = 0 (module default)
    loss = jax.block_until_ready(contrastive_loss(im, s, margin=0.0))
    ref = contrastive_loss_ref(im, s, margin=0.0)
    assert jnp.allclose(loss, ref, rtol=1e-5, atol=1e-4), (loss, ref)

    # also validate the closed-form diagonal correction with margin > 0
    loss_m = jax.block_until_ready(contrastive_loss(im, s, margin=0.2))
    ref_m = contrastive_loss_ref(im, s, margin=0.2)
    assert jnp.allclose(loss_m, ref_m, rtol=1e-5, atol=1e-4), (loss_m, ref_m)

    print("KERNEL_OK")
</pallas_src>

<mosaic_0001>
module attributes {stable_mosaic.version = 11 : i64} {
  func.func @_diag_kernel(%arg0: i32, %arg1: memref<8x32xf32, #tpu.memory_space<vmem>>, %arg2: memref<8x32xf32, #tpu.memory_space<vmem>>, %arg3: memref<8x1xf32, #tpu.memory_space<vmem>>) attributes {dimension_semantics = [#tpu.dimension_semantics<parallel>], iteration_bounds = array<i64: 1>, scalar_prefetch = 0 : i64, scratch_operands = 0 : i64, tpu.core_type = #tpu.core_type<tc>, window_params = [{transform_indices = @transform_0, window_bounds = array<i64: 8, 32>}, {transform_indices = @transform_1, window_bounds = array<i64: 8, 32>}, {transform_indices = @transform_2, window_bounds = array<i64: 8, 1>}]} {
    %c0 = arith.constant 0 : index
    %c0_0 = arith.constant 0 : index
    %0 = vector.load %arg1[%c0, %c0_0] : memref<8x32xf32, #tpu.memory_space<vmem>>, vector<8x32xf32>
    %c0_1 = arith.constant 0 : index
    %c0_2 = arith.constant 0 : index
    %1 = vector.load %arg2[%c0_1, %c0_2] : memref<8x32xf32, #tpu.memory_space<vmem>>, vector<8x32xf32>
    %2 = arith.mulf %0, %1 : vector<8x32xf32>
    %cst = arith.constant dense<0.000000e+00> : vector<8xf32>
    %3 = vector.multi_reduction <add>, %2, %cst [1] : vector<8x32xf32> to vector<8xf32>
    %4 = vector.shape_cast %3 : vector<8xf32> to vector<8x1xf32>
    %c0_3 = arith.constant 0 : index
    %c0_4 = arith.constant 0 : index
    %5 = vector.load %arg3[%c0_3, %c0_4] : memref<8x1xf32, #tpu.memory_space<vmem>>, vector<8x1xf32>
    tpu.vector_store %arg3[%c0_3, %c0_4], %4 {strides = array<i32>} : memref<8x1xf32, #tpu.memory_space<vmem>>, vector<8x1xf32>,
    return
  }
  func.func @transform_0(%arg0: i32) -> (i32, i32) {
    %c0_i32 = arith.constant 0 : i32
    %c0_i32_0 = arith.constant 0 : i32
    return %arg0, %c0_i32 : i32, i32
  }
  func.func @transform_1(%arg0: i32) -> (i32, i32) {
    %c0_i32 = arith.constant 0 : i32
    %c0_i32_0 = arith.constant 0 : i32
    return %arg0, %c0_i32 : i32, i32
  }
  func.func @transform_2(%arg0: i32) -> (i32, i32) {
    %c0_i32 = arith.constant 0 : i32
    %c0_i32_0 = arith.constant 0 : i32
    return %arg0, %c0_i32 : i32, i32
  }
}

</mosaic_0001>

<llo_original>
// kernel: tpu_custom_call.1
$region0: #{tpu_custom_call.1}
  #allocation0 [shape = 'u32[]', space=smem, size = 0x4, offset = 0x4, fixed_abs, tag = 'smem constant byte address 0x4 - core index']
  #allocation1 [shape = 'u32[144,128]{1,0:T(1,128)}', space=vmem, size = 0x12000, scoped, tag = 'internal scratch']
  %s0 = inlined_call_operand.hbm [shape: f32[8,32], index: 0, kind: input, shape index: {}]
  %s1 = inlined_call_operand.hbm [shape: f32[8,32], index: 1, kind: input, shape index: {}]
  %s2 = inlined_call_operand.vmem [shape: f32[8,1], index: 2, kind: output, shape index: {}]
  %s3 = sld [smem:[#allocation0]]
  $region26: #{tpu_custom_call.1} parent=0
    _
  %s5 = ssub.s32 1, %s3
  %s6 = scalar_select 0, %s5, %s3
  $region1: #{tpu_custom_call.1} parent=0
    #allocation2 [shape = 'u8[4096]{0}', space=vmem, size = 0x1000, scoped, tag = 'input window, operand 0, single buffered']
    #allocation3 [shape = 's32[1]{0}', space=sflag, size = 0x4, scoped, tag = 'scoped memory for tpu_custom_call.1']
    #allocation4 [shape = 'u8[4096]{0}', space=vmem, size = 0x1000, scoped, tag = 'input window, operand 1, single buffered']
    #allocation5 [shape = 's32[1]{0}', space=sflag, size = 0x4, scoped, tag = 'scoped memory for tpu_custom_call.1']
    %7 = vsyncpa [#allocation3], 0
    %8 = vsyncpa [#allocation5], 0
    // Predicated region
    $region2: #{tpu_custom_call.1} parent=1 // pred_check
      _
    $region3: #{tpu_custom_call.1} parent=1 // pred_check_branch
      %10 = sbr.rel (0) target = $region5
    $region4: #{tpu_custom_call.1} parent=1 // pred_region
      %s12 = ssub.s32 128, 128
      %13 = vsyncadd [#allocation3], %s12
      %s15 = sshll.u32 [#allocation2], 4
      %s16 = int_to_ptr.vmem [resolvable:$true] %s15
      %18 = dma.hbm_to_vmem [thread:$0]  %s0, 128, %s16, [#allocation3]
    $region5: #{tpu_custom_call.1} parent=1 // pred_fallthru
      _
    // Predicated region
    $region6: #{tpu_custom_call.1} parent=1 // pred_check
      _
    $region7: #{tpu_custom_call.1} parent=1 // pred_check_branch
      %20 = sbr.rel (0) target = $region9
    $region8: #{tpu_custom_call.1} parent=1 // pred_region
      %s22 = ssub.s32 128, 128
      %23 = vsyncadd [#allocation5], %s22
      %s25 = sshll.u32 [#allocation4], 4
      %s26 = int_to_ptr.vmem [resolvable:$true] %s25
      %28 = dma.hbm_to_vmem [thread:$0]  %s1, 128, %s26, [#allocation5]
    $region9: #{tpu_custom_call.1} parent=1 // pred_fallthru
      _
    // Predicated region
    $region10: #{tpu_custom_call.1} parent=1 // pred_check
      _
    $region11: #{tpu_custom_call.1} parent=1 // pred_check_branch
      %30 = sbr.rel (0) target = $region13
    $region12: #{tpu_custom_call.1} parent=1 // pred_region
      %31 = dma.done [#allocation3], 128
    $region13: #{tpu_custom_call.1} parent=1 // pred_fallthru
      _
    // Predicated region
    $region14: #{tpu_custom_call.1} parent=1 // pred_check
      _
    $region15: #{tpu_custom_call.1} parent=1 // pred_check_branch
      %33 = sbr.rel (0) target = $region17
    $region16: #{tpu_custom_call.1} parent=1 // pred_region
      %34 = dma.done [#allocation5], 128
    $region17: #{tpu_custom_call.1} parent=1 // pred_fallthru
      _
    %v35 = vld [vmem:[#allocation2] sm:$0xff]
    %v36 = vld [vmem:[#allocation4] sm:$0xff]
    %v37 = vmul.f32 %v35, %v36
    %vm38 = vcmask 261120
    %v39 = vsel %vm38, %v37, 0.0
    %40 = vadd.xlane.f32.xlu0 %v39
    %v41 = vpop.xlane.xlu0 %40
    %vm42 = vcmask 7168
    %43 = vst.msk [vmem:[%s2] sm:$0xff] %vm42, %v41
    // Predicated region
    $region18: #{tpu_custom_call.1} parent=1 // pred_check
      _
    $region19: #{tpu_custom_call.1} parent=1 // pred_check_branch
      %45 = sbr.rel (0) target = $region21
    $region20: #{tpu_custom_call.1} parent=1 // pred_region
      _
    $region21: #{tpu_custom_call.1} parent=1 // pred_fallthru
      _
    // Predicated region
    $region22: #{tpu_custom_call.1} parent=1 // pred_check
      _
    $region23: #{tpu_custom_call.1} parent=1 // pred_check_branch
      %47 = sbr.rel (0) target = $region25
    $region24: #{tpu_custom_call.1} parent=1 // pred_region
      _
    $region25: #{tpu_custom_call.1} parent=1 // pred_fallthru
      _
    %48 = vsyncpa [#allocation3], 1
    %49 = vsyncpa [#allocation5], 1

</llo_original>
